<compile_context>
chip_gen: v7x
topology: tpu7x:2x2x1
jax: 0.10.0
libtpu: 0.0.40
codegen_flags: <defaults>
</compile_context>

<pallas_src>
import jax
import jax.numpy as jnp
from jax.experimental import pallas as pl
from jax.experimental.pallas import tpu as pltpu

_LANES = 128
_ROW_ALIGN = 32                      # covers f32(8)/bf16(16)/int8+fp8(32) sublane tiles
_SMALL_FASTPATH_ELEMS = 128 * 1024   # below this, plain XLA fusion beats pallas overhead
_MIN_GRID_STEPS = 8                  # keep >=2 blocks so both v7x TensorCores get work
_MAX_BLOCK_BYTES = 8 << 20           # per-block input bytes cap (keeps VMEM use bounded)
_VMEM_HEADROOM = 8 << 20
_VMEM_FLOOR = 16 << 20
_VMEM_CAP = 48 << 20                 # stay well under v7x's 64 MiB per-TC VMEM


def _make_scaled_tanh_kernel(coef):
    def kernel(x_ref, o_ref):
        # tanh -> EUP, mul -> VPU; coef is a trace-time constant.  Both units
        # have huge slack at the HBM roofline, so no compute tricks needed.
        o_ref[...] = jnp.tanh(x_ref[...]) * jnp.asarray(coef, dtype=o_ref.dtype)

    return kernel


def _default_block_bytes() -> int:
    """Generation-aware default block size (per-step input bytes)."""
    try:
        kind = jax.devices()[0].device_kind.lower()
    except Exception:  # pragma: no cover - defensive; 2 MiB is safe everywhere
        return 2 << 20
    if "v6" in kind or "trillium" in kind:
        return 8 << 20   # 1.4 TB/s HBM: amortize the ~0.35us/step overhead to ~3%
    if "v7" in kind or "tpu7" in kind or "7x" in kind:
        return 4 << 20   # 3.2 TB/s HBM but only 64 MiB VMEM/TC: 4*4=16 MiB buffered
    return 2 << 20       # v5e (0.82 TB/s, 16 MiB scoped-VMEM default), v4/v5p, unknown


def _row_tile(rows: int, itemsize: int, block_bytes: int) -> int:
    """Rows per block: big lane-dense blocks, but >= _MIN_GRID_STEPS grid steps
    whenever the array is large enough (v7x dual-TC sharding)."""
    block_bytes = min(block_bytes, _MAX_BLOCK_BYTES)
    tr_target = max(
        _ROW_ALIGN,
        (block_bytes // (_LANES * itemsize)) // _ROW_ALIGN * _ROW_ALIGN,
    )
    if rows < _MIN_GRID_STEPS * _ROW_ALIGN:
        # Tiny array: one full-extent block (or tr_target-aligned blocks).
        return min(tr_target, rows)
    split = max(_ROW_ALIGN, (rows // _MIN_GRID_STEPS) // _ROW_ALIGN * _ROW_ALIGN)
    return min(tr_target, split)


def _scaled_tanh_2d(x2d: jax.Array, coef, tr: int, donate_input: bool) -> jax.Array:
    rows, lanes = x2d.shape
    itemsize = x2d.dtype.itemsize
    # Double-buffered input + output blocks, plus generous headroom.
    vmem_limit = max(
        _VMEM_FLOOR, min(4 * tr * lanes * itemsize + _VMEM_HEADROOM, _VMEM_CAP)
    )
    grid = (pl.cdiv(rows, tr),)
    return pl.pallas_call(
        _make_scaled_tanh_kernel(coef),
        out_shape=jax.ShapeDtypeStruct((rows, lanes), x2d.dtype),
        grid_spec=pltpu.PrefetchScalarGridSpec(
            num_scalar_prefetch=0,
            grid=grid,
            in_specs=[pl.BlockSpec((tr, lanes), lambda i: (i, 0))],
            out_specs=pl.BlockSpec((tr, lanes), lambda i: (i, 0)),
        ),
        compiler_params=pltpu.CompilerParams(
            # Single parallel axis -> shards grid steps across both TCs on v7x.
            dimension_semantics=("parallel",),
            vmem_limit_bytes=int(vmem_limit),
        ),
        # Only a real in-place update if the caller donates x at the jit
        # boundary; otherwise XLA inserts a protective copy (still correct).
        input_output_aliases={0: 0} if donate_input else {},
    )(x2d)


def scaled_tanh(
    x: jax.Array,
    coef: float = 10.0,
    *,
    block_bytes: int | None = None,
    donate_input: bool = False,
    force_pallas: bool = False,
) -> jax.Array:
    """Elementwise tanh(x) * coef, matching ScaledTanh.forward semantics."""
    orig_shape = x.shape
    total = x.size
    itemsize = x.dtype.itemsize

    # Fast path: tiny activations are cheaper as a fused XLA elementwise op.
    if total == 0 or (not force_pallas and total < _SMALL_FASTPATH_ELEMS):
        return jnp.tanh(x) * jnp.asarray(coef, dtype=x.dtype)

    if block_bytes is None:
        block_bytes = _default_block_bytes()

    x_flat = jnp.reshape(x, (-1,))
    rem = total % _LANES
    aligned = total - rem

    if rem == 0:
        # Hot path: pure reshape to a lane-dense 2D view, no HBM copies.
        rows = total // _LANES
        tr = _row_tile(rows, itemsize, block_bytes)
        out2d = _scaled_tanh_2d(
            jnp.reshape(x_flat, (rows, _LANES)), coef, tr, donate_input
        )
        return jnp.reshape(out2d, orig_shape)

    # Cold path (total not a multiple of 128): kernel on the aligned prefix,
    # tiny (<128 element) tail in plain jnp.  Avoids the full-array pad /
    # output-slice copies of the naive approach.
    if aligned == 0:
        return jnp.tanh(x) * jnp.asarray(coef, dtype=x.dtype)
    head = jax.lax.slice(x_flat, (0,), (aligned,))
    tail = jax.lax.slice(x_flat, (aligned,), (total,))
    rows = aligned // _LANES
    tr = _row_tile(rows, itemsize, block_bytes)
    out_head = _scaled_tanh_2d(
        jnp.reshape(head, (rows, _LANES)), coef, tr, donate_input
    )
    out_tail = jnp.tanh(tail) * jnp.asarray(coef, dtype=x.dtype)
    out_flat = jnp.concatenate([jnp.reshape(out_head, (-1,)), out_tail])
    return jnp.reshape(out_flat, orig_shape)


if __name__ == "__main__":
    coef = 10.0  # ScaledTanh default

    # 1) Small NCHW input consistent with the ConvLSTM module; force the Pallas
    #    path so the kernel itself compiles and runs.
    key = jax.random.PRNGKey(0)
    x = jax.random.normal(key, (2, 4, 16, 16), dtype=jnp.float32)
    out = jax.block_until_ready(scaled_tanh(x, coef, force_pallas=True))
    ref = jnp.tanh(x) * coef
    assert out.shape == x.shape and out.dtype == x.dtype
    assert jnp.allclose(out, ref, atol=1e-6, rtol=1e-6)

    # 2) Same input through the default small-input fast path.
    out_fp = jax.block_until_ready(scaled_tanh(x, coef))
    assert jnp.allclose(out_fp, ref, atol=1e-6, rtol=1e-6)

    # 3) Larger aligned input: exercises the default Pallas path with a
    #    multi-step grid (>= _MIN_GRID_STEPS blocks).
    x3 = jax.random.normal(jax.random.PRNGKey(0), (2, 8, 128, 128), dtype=jnp.float32)
    out3 = jax.block_until_ready(scaled_tanh(x3, coef))
    ref3 = jnp.tanh(x3) * coef
    assert out3.shape == x3.shape and out3.dtype == x3.dtype
    assert jnp.allclose(out3, ref3, atol=1e-6, rtol=1e-6)

    # 4) Awkward shape (size % 128 != 0): exercises the aligned-prefix +
    #    jnp-tail cold path.
    x4 = jax.random.normal(jax.random.PRNGKey(0), (1, 3, 40, 24), dtype=jnp.float32)
    out4 = jax.block_until_ready(scaled_tanh(x4, coef, force_pallas=True))
    ref4 = jnp.tanh(x4) * coef
    assert out4.shape == x4.shape and out4.dtype == x4.dtype
    assert jnp.allclose(out4, ref4, atol=1e-6, rtol=1e-6)

    print("KERNEL_OK")
</pallas_src>

<mosaic_0001>
module attributes {stable_mosaic.version = 11 : i64} {
  func.func @kernel(%arg0: i32, %arg1: memref<16x128xf32, #tpu.memory_space<vmem>>, %arg2: memref<16x128xf32, #tpu.memory_space<vmem>>) attributes {dimension_semantics = [#tpu.dimension_semantics<parallel>], iteration_bounds = array<i64: 1>, scalar_prefetch = 0 : i64, scratch_operands = 0 : i64, tpu.core_type = #tpu.core_type<tc>, window_params = [{transform_indices = @transform_0, window_bounds = array<i64: 16, 128>}, {transform_indices = @transform_1, window_bounds = array<i64: 16, 128>}]} {
    %c0 = arith.constant 0 : index
    %c0_0 = arith.constant 0 : index
    %0 = vector.load %arg1[%c0, %c0_0] : memref<16x128xf32, #tpu.memory_space<vmem>>, vector<16x128xf32>
    %1 = math.tanh %0 : vector<16x128xf32>
    %cst = arith.constant 1.000000e+01 : f32
    %2 = vector.broadcast %cst : f32 to vector<16x128xf32>
    %3 = arith.mulf %1, %2 : vector<16x128xf32>
    %c0_1 = arith.constant 0 : index
    %c0_2 = arith.constant 0 : index
    %4 = vector.load %arg2[%c0_1, %c0_2] : memref<16x128xf32, #tpu.memory_space<vmem>>, vector<16x128xf32>
    tpu.vector_store %arg2[%c0_1, %c0_2], %3 {strides = array<i32>} : memref<16x128xf32, #tpu.memory_space<vmem>>, vector<16x128xf32>,
    return
  }
  func.func @transform_0(%arg0: i32) -> (i32, i32) {
    %c0_i32 = arith.constant 0 : i32
    %c0_i32_0 = arith.constant 0 : i32
    return %arg0, %c0_i32 : i32, i32
  }
  func.func @transform_1(%arg0: i32) -> (i32, i32) {
    %c0_i32 = arith.constant 0 : i32
    %c0_i32_0 = arith.constant 0 : i32
    return %arg0, %c0_i32 : i32, i32
  }
}

</mosaic_0001>

<llo_original>
// kernel: tpu_custom_call.1
$region0: #{tpu_custom_call.1}
  #allocation0 [shape = 'u32[]', space=smem, size = 0x4, offset = 0x4, fixed_abs, tag = 'smem constant byte address 0x4 - core index']
  #allocation1 [shape = 'u32[144,128]{1,0:T(1,128)}', space=vmem, size = 0x12000, scoped, tag = 'internal scratch']
  %s0 = inlined_call_operand.hbm [shape: f32[16,128], index: 0, kind: input, shape index: {}]
  %s1 = inlined_call_operand.hbm [shape: f32[16,128], index: 1, kind: output, shape index: {}]
  %s2 = sld [smem:[#allocation0]]
  $region18: #{tpu_custom_call.1} parent=0
    _
  %s4 = ssub.s32 1, %s2
  %s5 = scalar_select 0, %s4, %s2
  $region1: #{tpu_custom_call.1} parent=0
    #allocation2 [shape = 'u8[8192]{0}', space=vmem, size = 0x2000, scoped, tag = 'input window, operand 0, single buffered']
    #allocation3 [shape = 's32[1]{0}', space=sflag, size = 0x4, scoped, tag = 'scoped memory for tpu_custom_call.1']
    #allocation4 [shape = 's32[1]{0}', space=sflag, size = 0x4, scoped, tag = 'scoped memory for tpu_custom_call.1']
    #allocation5 [shape = 'u8[8192]{0}', space=vmem, size = 0x2000, scoped, tag = 'output window, operand 0, single buffered']
    %6 = vsyncpa [#allocation3], 0
    %7 = vsyncpa [#allocation4], 0
    // Predicated region
    $region2: #{tpu_custom_call.1} parent=1 // pred_check
      _
    $region3: #{tpu_custom_call.1} parent=1 // pred_check_branch
      %9 = sbr.rel (0) target = $region5
    $region4: #{tpu_custom_call.1} parent=1 // pred_region
      %s11 = ssub.s32 256, 256
      %12 = vsyncadd [#allocation3], %s11
      %s13 = sshll.u32 [#allocation2], 4
      %s14 = int_to_ptr.vmem [resolvable:$true] %s13
      %19 = dma.hbm_to_vmem [thread:$0]  %s0, 256, %s14, [#allocation3], 128, 128, 8
    $region5: #{tpu_custom_call.1} parent=1 // pred_fallthru
      _
    // Predicated region
    $region6: #{tpu_custom_call.1} parent=1 // pred_check
      _
    $region7: #{tpu_custom_call.1} parent=1 // pred_check_branch
      %21 = sbr.rel (0) target = $region9
    $region8: #{tpu_custom_call.1} parent=1 // pred_region
      %22 = dma.done [#allocation3], 256
    $region9: #{tpu_custom_call.1} parent=1 // pred_fallthru
      _
    %v23 = vld [vmem:[#allocation2] sm:$0xff]
    %v24 = vld [vmem:[#allocation2 + $0x8] sm:$0xff]
    %v25 = vtanh.pop %v23
    %v26 = vtanh.pop %v24
    %v27 = vmul.f32 %v25, 10.0
    %v28 = vmul.f32 %v26, 10.0
    %29 = vst [vmem:[#allocation5] sm:$0xff] %v27
    %30 = vst [vmem:[#allocation5 + $0x8] sm:$0xff] %v28
    // Predicated region
    $region10: #{tpu_custom_call.1} parent=1 // pred_check
      _
    $region11: #{tpu_custom_call.1} parent=1 // pred_check_branch
      %32 = sbr.rel (0) target = $region13
    $region12: #{tpu_custom_call.1} parent=1 // pred_region
      %s34 = ssub.s32 256, 256
      %35 = vsyncadd [#allocation4], %s34
      %s36 = sshll.u32 [#allocation5], 4
      %s37 = int_to_ptr.vmem [resolvable:$true] %s36
      %42 = dma.vmem_to_hbm [thread:$0]  %s37, 256, %s1, [#allocation4], 128, 128, 8
    $region13: #{tpu_custom_call.1} parent=1 // pred_fallthru
      _
    // Predicated region
    $region14: #{tpu_custom_call.1} parent=1 // pred_check
      _
    $region15: #{tpu_custom_call.1} parent=1 // pred_check_branch
      %44 = sbr.rel (0) target = $region17
    $region16: #{tpu_custom_call.1} parent=1 // pred_region
      %45 = dma.done [#allocation4], 256
    $region17: #{tpu_custom_call.1} parent=1 // pred_fallthru
      _
    %46 = vsyncpa [#allocation3], 1
    %47 = vsyncpa [#allocation4], 1

</llo_original>
